<compile_context>
chip_gen: v5e
topology: v5e:2x2
jax: 0.10.0
libtpu: 0.0.40
codegen_flags: <defaults>
</compile_context>

<pallas_src>
import functools

import jax
import jax.numpy as jnp
from jax.experimental import pallas as pl
from jax.experimental.pallas import tpu as pltpu

_LANE = 128      # vreg lane width
_SUBLANE = 8     # f32 sublane count


def _round_up(x, m):
    return ((x + m - 1) // m) * m


# ---------------------------------------------------------------------------
# Kernel: one batch tile of the full 3-layer MLP.
# ---------------------------------------------------------------------------
def _policy_kernel(obs_ref, w1_ref, b1_ref, w2_ref, b2_ref, w3_ref, b3_ref,
                   out_ref):
    """obs_ref: [TB, obs_dim]
       w1_ref : [obs_dim, Hp]   b1_ref: [1, Hp]
       w2_ref : [Hp, Hp]        b2_ref: [1, Hp]
       w3_ref : [Hp, Ap]        b3_ref: [1, Ap]
       out_ref: [TB, Ap]        (Hp, Ap are multiples of 128)
    """
    x = obs_ref[...]

    # Layer 1: Linear + ReLU (MXU matmul, f32 accumulate; VPU bias/relu)
    h = jnp.dot(x, w1_ref[...], preferred_element_type=jnp.float32)
    h = jnp.maximum(h + b1_ref[...], 0.0)

    # Layer 2: Linear + ReLU
    h = jnp.dot(h, w2_ref[...], preferred_element_type=jnp.float32)
    h = jnp.maximum(h + b2_ref[...], 0.0)

    # Output layer: Linear + Tanh (tanh goes to the EUP)
    a = jnp.dot(h, w3_ref[...], preferred_element_type=jnp.float32)
    out_ref[...] = jnp.tanh(a + b3_ref[...]).astype(out_ref.dtype)


# ---------------------------------------------------------------------------
# Parameter prep: zero-pad hidden / act dims to multiples of 128 (lane-dense).
# Done once, outside the hot path. Zero padding is exact: padded hidden units
# produce 0 through ReLU and contribute nothing downstream; padded action
# columns are sliced off after the call.
# ---------------------------------------------------------------------------
def prepare_params(params):
    w1, b1 = params["w1"], params["b1"]
    w2, b2 = params["w2"], params["b2"]
    w3, b3 = params["w3"], params["b3"]

    obs_dim, hidden = w1.shape
    act_dim = w3.shape[1]
    hp = _round_up(hidden, _LANE)
    ap = _round_up(act_dim, _LANE)

    def pad2d(a, shape):
        out = jnp.zeros(shape, a.dtype)
        return out.at[: a.shape[0], : a.shape[1]].set(a)

    return {
        "w1": pad2d(w1, (obs_dim, hp)), "b1": pad2d(b1, (1, hp)),
        "w2": pad2d(w2, (hp, hp)),      "b2": pad2d(b2, (1, hp)),
        "w3": pad2d(w3, (hp, ap)),      "b3": pad2d(b3, (1, ap)),
    }


# ---------------------------------------------------------------------------
# Forward wrapper.
# ---------------------------------------------------------------------------
@functools.partial(jax.jit, static_argnames=("act_dim", "tile_b"))
def deterministic_policy_forward(obs, padded_params, *, act_dim, tile_b=256):
    """obs: [B, obs_dim] f32; padded_params: output of prepare_params()."""
    w1, b1 = padded_params["w1"], padded_params["b1"]
    w2, b2 = padded_params["w2"], padded_params["b2"]
    w3, b3 = padded_params["w3"], padded_params["b3"]

    B, obs_dim = obs.shape
    hidden_p = w1.shape[1]
    act_p = w3.shape[1]

    # Batch tile: big by default (amortize per-step overhead / feed the MXU),
    # shrunk to the (sublane-aligned) batch for small inputs. Ragged batches
    # are zero-padded and sliced off afterwards.
    tb = min(tile_b, _round_up(B, _SUBLANE))
    b_padded = _round_up(B, tb)
    if b_padded != B:
        obs = jnp.pad(obs, ((0, b_padded - B), (0, 0)))

    grid = (b_padded // tb,)

    # Weights/biases: whole tensor every step, constant index_map. Pallas
    # detects the unchanged block index and does not re-DMA them per step.
    def wspec(shape):
        return pl.BlockSpec(shape, lambda i: (0, 0))

    in_specs = [
        pl.BlockSpec((tb, obs_dim), lambda i: (i, 0)),   # obs tile (batch-tiled)
        wspec((obs_dim, hidden_p)),                      # w1
        wspec((1, hidden_p)),                            # b1
        wspec((hidden_p, hidden_p)),                     # w2
        wspec((1, hidden_p)),                            # b2
        wspec((hidden_p, act_p)),                        # w3
        wspec((1, act_p)),                               # b3
    ]
    out_spec = pl.BlockSpec((tb, act_p), lambda i: (i, 0))   # lane-dense output

    flops = 2 * b_padded * (obs_dim * hidden_p + hidden_p * hidden_p
                            + hidden_p * act_p)
    bytes_accessed = 4 * (b_padded * obs_dim
                          + obs_dim * hidden_p + hidden_p
                          + hidden_p * hidden_p + hidden_p
                          + hidden_p * act_p + act_p
                          + b_padded * act_p)
    cost = pl.CostEstimate(flops=flops,
                           transcendentals=b_padded * act_p,
                           bytes_accessed=bytes_accessed)

    out = pl.pallas_call(
        _policy_kernel,
        out_shape=jax.ShapeDtypeStruct((b_padded, act_p), jnp.float32),
        grid_spec=pltpu.PrefetchScalarGridSpec(
            num_scalar_prefetch=0,
            grid=grid,
            in_specs=in_specs,
            out_specs=out_spec,
        ),
        compiler_params=pltpu.CompilerParams(
            dimension_semantics=("parallel",)),
        cost_estimate=cost,
    )(obs, w1, b1, w2, b2, w3, b3)

    return out[:B, :act_dim]


# ---------------------------------------------------------------------------
# Init + pure-JAX reference (matches torch nn.Linear default init / forward).
# ---------------------------------------------------------------------------
def init_params(key, obs_dim, act_dim, hidden_dim):
    ks = jax.random.split(key, 6)

    def linear(kw, kb, fan_in, fan_out):
        bound = 1.0 / jnp.sqrt(fan_in)
        w = jax.random.uniform(kw, (fan_in, fan_out), jnp.float32, -bound, bound)
        b = jax.random.uniform(kb, (1, fan_out), jnp.float32, -bound, bound)
        return w, b

    w1, b1 = linear(ks[0], ks[1], obs_dim, hidden_dim)
    w2, b2 = linear(ks[2], ks[3], hidden_dim, hidden_dim)
    w3, b3 = linear(ks[4], ks[5], hidden_dim, act_dim)
    return {"w1": w1, "b1": b1, "w2": w2, "b2": b2, "w3": w3, "b3": b3}


def reference_forward(obs, p):
    h = jnp.maximum(obs @ p["w1"] + p["b1"], 0.0)
    h = jnp.maximum(h @ p["w2"] + p["b2"], 0.0)
    return jnp.tanh(h @ p["w3"] + p["b3"])


if __name__ == "__main__":
    # DeterministicPolicy(obs_dim=16, act_dim=4, hidden_dim=32, n_hidden=2), batch=8.
    B, OBS_DIM, ACT_DIM, HIDDEN = 8, 16, 4, 32

    key = jax.random.PRNGKey(0)
    k_obs, k_params = jax.random.split(key)
    obs = jax.random.normal(k_obs, (B, OBS_DIM), jnp.float32)
    params = init_params(k_params, OBS_DIM, ACT_DIM, HIDDEN)
    padded_params = prepare_params(params)

    out = deterministic_policy_forward(obs, padded_params, act_dim=ACT_DIM,
                                       tile_b=256)
    out = jax.block_until_ready(out)

    ref = reference_forward(obs, params)
    assert out.shape == (B, ACT_DIM)
    assert jnp.allclose(out, ref, atol=1e-5, rtol=1e-5), "mismatch vs JAX reference"

    print("KERNEL_OK")
</pallas_src>

<mosaic_0001>
module attributes {stable_mosaic.version = 11 : i64} {
  func.func @_policy_kernel(%arg0: i32, %arg1: memref<8x16xf32, #tpu.memory_space<vmem>>, %arg2: memref<16x128xf32, #tpu.memory_space<vmem>>, %arg3: memref<1x128xf32, #tpu.memory_space<vmem>>, %arg4: memref<128x128xf32, #tpu.memory_space<vmem>>, %arg5: memref<1x128xf32, #tpu.memory_space<vmem>>, %arg6: memref<128x128xf32, #tpu.memory_space<vmem>>, %arg7: memref<1x128xf32, #tpu.memory_space<vmem>>, %arg8: memref<8x128xf32, #tpu.memory_space<vmem>>) attributes {dimension_semantics = [#tpu.dimension_semantics<parallel>], iteration_bounds = array<i64: 1>, scalar_prefetch = 0 : i64, scratch_operands = 0 : i64, tpu.core_type = #tpu.core_type<tc>, window_params = [{transform_indices = @transform_0, window_bounds = array<i64: 8, 16>}, {pipeline_mode = #tpu.pipeline_mode<synchronous>, transform_indices = @transform_1, window_bounds = array<i64: 16, 128>}, {pipeline_mode = #tpu.pipeline_mode<synchronous>, transform_indices = @transform_2, window_bounds = array<i64: 1, 128>}, {pipeline_mode = #tpu.pipeline_mode<synchronous>, transform_indices = @transform_3, window_bounds = array<i64: 128, 128>}, {pipeline_mode = #tpu.pipeline_mode<synchronous>, transform_indices = @transform_4, window_bounds = array<i64: 1, 128>}, {pipeline_mode = #tpu.pipeline_mode<synchronous>, transform_indices = @transform_5, window_bounds = array<i64: 128, 128>}, {pipeline_mode = #tpu.pipeline_mode<synchronous>, transform_indices = @transform_6, window_bounds = array<i64: 1, 128>}, {transform_indices = @transform_7, window_bounds = array<i64: 8, 128>}]} {
    %c0 = arith.constant 0 : index
    %c0_0 = arith.constant 0 : index
    %0 = vector.load %arg1[%c0, %c0_0] : memref<8x16xf32, #tpu.memory_space<vmem>>, vector<8x16xf32>
    %c0_1 = arith.constant 0 : index
    %c0_2 = arith.constant 0 : index
    %1 = vector.load %arg2[%c0_1, %c0_2] : memref<16x128xf32, #tpu.memory_space<vmem>>, vector<16x128xf32>
    %cst = arith.constant dense<0.000000e+00> : vector<8x128xf32>
    %2 = tpu.matmul %0, %1, %cst {dimension_numbers = #tpu.dot_dimension_numbers<[1], [0], [0], [1], [0, 0, 1, 1], [], []>} : vector<8x16xf32>, vector<16x128xf32>, vector<8x128xf32> -> vector<8x128xf32>
    %c0_3 = arith.constant 0 : index
    %c0_4 = arith.constant 0 : index
    %3 = vector.load %arg3[%c0_3, %c0_4] : memref<1x128xf32, #tpu.memory_space<vmem>>, vector<1x128xf32>
    %4 = vector.broadcast %3 : vector<1x128xf32> to vector<8x128xf32>
    %5 = arith.addf %2, %4 : vector<8x128xf32>
    %cst_5 = arith.constant 0.000000e+00 : f32
    %6 = vector.broadcast %cst_5 : f32 to vector<8x128xf32>
    %7 = arith.maximumf %5, %6 : vector<8x128xf32>
    %c0_6 = arith.constant 0 : index
    %c0_7 = arith.constant 0 : index
    %8 = vector.load %arg4[%c0_6, %c0_7] : memref<128x128xf32, #tpu.memory_space<vmem>>, vector<128x128xf32>
    %cst_8 = arith.constant dense<0.000000e+00> : vector<8x128xf32>
    %9 = tpu.matmul %7, %8, %cst_8 {dimension_numbers = #tpu.dot_dimension_numbers<[1], [0], [0], [1], [0, 0, 1, 1], [], []>} : vector<8x128xf32>, vector<128x128xf32>, vector<8x128xf32> -> vector<8x128xf32>
    %c0_9 = arith.constant 0 : index
    %c0_10 = arith.constant 0 : index
    %10 = vector.load %arg5[%c0_9, %c0_10] : memref<1x128xf32, #tpu.memory_space<vmem>>, vector<1x128xf32>
    %11 = vector.broadcast %10 : vector<1x128xf32> to vector<8x128xf32>
    %12 = arith.addf %9, %11 : vector<8x128xf32>
    %cst_11 = arith.constant 0.000000e+00 : f32
    %13 = vector.broadcast %cst_11 : f32 to vector<8x128xf32>
    %14 = arith.maximumf %12, %13 : vector<8x128xf32>
    %c0_12 = arith.constant 0 : index
    %c0_13 = arith.constant 0 : index
    %15 = vector.load %arg6[%c0_12, %c0_13] : memref<128x128xf32, #tpu.memory_space<vmem>>, vector<128x128xf32>
    %cst_14 = arith.constant dense<0.000000e+00> : vector<8x128xf32>
    %16 = tpu.matmul %14, %15, %cst_14 {dimension_numbers = #tpu.dot_dimension_numbers<[1], [0], [0], [1], [0, 0, 1, 1], [], []>} : vector<8x128xf32>, vector<128x128xf32>, vector<8x128xf32> -> vector<8x128xf32>
    %c0_15 = arith.constant 0 : index
    %c0_16 = arith.constant 0 : index
    %17 = vector.load %arg7[%c0_15, %c0_16] : memref<1x128xf32, #tpu.memory_space<vmem>>, vector<1x128xf32>
    %18 = vector.broadcast %17 : vector<1x128xf32> to vector<8x128xf32>
    %19 = arith.addf %16, %18 : vector<8x128xf32>
    %20 = math.tanh %19 : vector<8x128xf32>
    %c0_17 = arith.constant 0 : index
    %c0_18 = arith.constant 0 : index
    %21 = vector.load %arg8[%c0_17, %c0_18] : memref<8x128xf32, #tpu.memory_space<vmem>>, vector<8x128xf32>
    tpu.vector_store %arg8[%c0_17, %c0_18], %20 {strides = array<i32>} : memref<8x128xf32, #tpu.memory_space<vmem>>, vector<8x128xf32>,
    return
  }
  func.func @transform_0(%arg0: i32) -> (i32, i32) {
    %c0_i32 = arith.constant 0 : i32
    %c0_i32_0 = arith.constant 0 : i32
    return %arg0, %c0_i32 : i32, i32
  }
  func.func @transform_1(%arg0: i32) -> (i32, i32) {
    %c0_i32 = arith.constant 0 : i32
    %c0_i32_0 = arith.constant 0 : i32
    %c0_i32_1 = arith.constant 0 : i32
    return %c0_i32, %c0_i32_0 : i32, i32
  }
  func.func @transform_2(%arg0: i32) -> (i32, i32) {
    %c0_i32 = arith.constant 0 : i32
    %c0_i32_0 = arith.constant 0 : i32
    %c0_i32_1 = arith.constant 0 : i32
    return %c0_i32, %c0_i32_0 : i32, i32
  }
  func.func @transform_3(%arg0: i32) -> (i32, i32) {
    %c0_i32 = arith.constant 0 : i32
    %c0_i32_0 = arith.constant 0 : i32
    %c0_i32_1 = arith.constant 0 : i32
    return %c0_i32, %c0_i32_0 : i32, i32
  }
  func.func @transform_4(%arg0: i32) -> (i32, i32) {
    %c0_i32 = arith.constant 0 : i32
    %c0_i32_0 = arith.constant 0 : i32
    %c0_i32_1 = arith.constant 0 : i32
    return %c0_i32, %c0_i32_0 : i32, i32
  }
  func.func @transform_5(%arg0: i32) -> (i32, i32) {
    %c0_i32 = arith.constant 0 : i32
    %c0_i32_0 = arith.constant 0 : i32
    %c0_i32_1 = arith.constant 0 : i32
    return %c0_i32, %c0_i32_0 : i32, i32
  }
  func.func @transform_6(%arg0: i32) -> (i32, i32) {
    %c0_i32 = arith.constant 0 : i32
    %c0_i32_0 = arith.constant 0 : i32
    %c0_i32_1 = arith.constant 0 : i32
    return %c0_i32, %c0_i32_0 : i32, i32
  }
  func.func @transform_7(%arg0: i32) -> (i32, i32) {
    %c0_i32 = arith.constant 0 : i32
    %c0_i32_0 = arith.constant 0 : i32
    return %arg0, %c0_i32 : i32, i32
  }
}

</mosaic_0001>

<llo_original>
// kernel: deterministic_policy_forward.1
$region0: #{deterministic_policy_forward.1}
  #allocation0 [shape = 'u32[]', space=smem, size = 0x4, offset = 0x4, fixed_abs, tag = 'smem constant byte address 0x4 - core index']
  #allocation1 [shape = 'u32[72,128]{1,0:T(1,128)}', space=vmem, size = 0x9000, scoped, tag = 'internal scratch']
  %s0 = inlined_call_operand.hbm [shape: f32[8,16], index: 0, kind: input, shape index: {}]
  %s1 = inlined_call_operand.hbm [shape: f32[16,128], index: 1, kind: input, shape index: {}]
  %s2 = inlined_call_operand.hbm [shape: f32[1,128], index: 2, kind: input, shape index: {}]
  %s3 = inlined_call_operand.hbm [shape: f32[128,128], index: 3, kind: input, shape index: {}]
  %s4 = inlined_call_operand.vmem [shape: f32[1,128], index: 4, kind: input, shape index: {}]
  %s5 = inlined_call_operand.hbm [shape: f32[128,128], index: 5, kind: input, shape index: {}]
  %s6 = inlined_call_operand.vmem [shape: f32[1,128], index: 6, kind: input, shape index: {}]
  %s7 = inlined_call_operand.vmem [shape: f32[8,128], index: 7, kind: output, shape index: {}]
  %s8 = sld [smem:[#allocation0]]
  $region58: #{deterministic_policy_forward.1} parent=0
    _
  %s10 = ssub.s32 1, %s8
  %s11 = scalar_select 0, %s10, %s8
  $region1: #{deterministic_policy_forward.1} parent=0
    #allocation2 [shape = 'u8[4096]{0}', space=vmem, size = 0x1000, scoped, tag = 'input window, operand 0, single buffered']
    #allocation3 [shape = 's32[1]{0}', space=sflag, size = 0x4, scoped, tag = 'scoped memory for deterministic_policy_forward.1']
    #allocation4 [shape = 'u8[8192]{0}', space=vmem, size = 0x2000, scoped, tag = 'input window, operand 1, single buffered']
    #allocation5 [shape = 's32[1]{0}', space=sflag, size = 0x4, scoped, tag = 'scoped memory for deterministic_policy_forward.1']
    #allocation6 [shape = 'u8[512]{0}', space=vmem, size = 0x400, scoped, tag = 'input window, operand 2, single buffered']
    #allocation7 [shape = 'u8[65536]{0}', space=vmem, size = 0x10000, scoped, tag = 'input window, operand 3, single buffered']
    #allocation8 [shape = 's32[1]{0}', space=sflag, size = 0x4, scoped, tag = 'scoped memory for deterministic_policy_forward.1']
    #allocation9 [shape = 'u8[65536]{0}', space=vmem, size = 0x10000, scoped, tag = 'input window, operand 5, single buffered']
    %12 = vsyncpa [#allocation3], 0
    %13 = vsyncpa [#allocation5], 0
    %14 = vsyncpa [#allocation8], 0
    // Predicated region
    $region2: #{deterministic_policy_forward.1} parent=1 // pred_check
      _
    $region3: #{deterministic_policy_forward.1} parent=1 // pred_check_branch
      %16 = sbr.rel (0) target = $region5
    $region4: #{deterministic_policy_forward.1} parent=1 // pred_region
      %18 = vsyncadd [#allocation3], 0
      %s20 = sshll.u32 %s0, 4
      %s21 = int_to_ptr.hbm [resolvable:$true] %s20
      %s22 = sshll.u32 [#allocation2], 4
      %s23 = int_to_ptr.vmem [resolvable:$true] %s22
      %25 = dma.hbm_to_vmem [thread:$0]  %s21, 128, %s23, [#allocation3]
    $region5: #{deterministic_policy_forward.1} parent=1 // pred_fallthru
      _
    // Predicated region
    $region6: #{deterministic_policy_forward.1} parent=1 // pred_check
      _
    $region7: #{deterministic_policy_forward.1} parent=1 // pred_check_branch
      %27 = sbr.rel (0) target = $region9
    $region8: #{deterministic_policy_forward.1} parent=1 // pred_region
      %29 = vsyncadd [#allocation5], 0
      %s30 = sshll.u32 %s1, 4
      %s31 = int_to_ptr.hbm [resolvable:$true] %s30
      %s32 = sshll.u32 [#allocation4], 4
      %s33 = int_to_ptr.vmem [resolvable:$true] %s32
      %38 = dma.hbm_to_vmem [thread:$0]  %s31, 256, %s33, [#allocation5], 128, 128, 8
    $region9: #{deterministic_policy_forward.1} parent=1 // pred_fallthru
      _
    // Predicated region
    $region10: #{deterministic_policy_forward.1} parent=1 // pred_check
      _
    $region11: #{deterministic_policy_forward.1} parent=1 // pred_check_branch
      %40 = sbr.rel (0) target = $region13
    $region12: #{deterministic_policy_forward.1} parent=1 // pred_region
      %42 = vsyncadd [#allocation5], 0
      %s44 = sshll.u32 %s2, 4
      %s45 = int_to_ptr.hbm [resolvable:$true] %s44
      %s46 = sshll.u32 [#allocation6], 4
      %s47 = int_to_ptr.vmem [resolvable:$true] %s46
      %49 = dma.hbm_to_vmem [thread:$0]  %s45, 16, %s47, [#allocation5]
    $region13: #{deterministic_policy_forward.1} parent=1 // pred_fallthru
      _
    // Predicated region
    $region14: #{deterministic_policy_forward.1} parent=1 // pred_check
      _
    $region15: #{deterministic_policy_forward.1} parent=1 // pred_check_branch
      %51 = sbr.rel (0) target = $region17
    $region16: #{deterministic_policy_forward.1} parent=1 // pred_region
      %53 = vsyncadd [#allocation8], 0
      %s54 = sshll.u32 %s3, 4
      %s55 = int_to_ptr.hbm [resolvable:$true] %s54
      %s56 = sshll.u32 [#allocation7], 4
      %s57 = int_to_ptr.vmem [resolvable:$true] %s56
      %62 = dma.hbm_to_vmem [thread:$0]  %s55, 2048, %s57, [#allocation8], 128, 128, 8
    $region17: #{deterministic_policy_forward.1} parent=1 // pred_fallthru
      _
    // Predicated region
    $region18: #{deterministic_policy_forward.1} parent=1 // pred_check
      _
    $region19: #{deterministic_policy_forward.1} parent=1 // pred_check_branch
      %64 = sbr.rel (0) target = $region21
    $region20: #{deterministic_policy_forward.1} parent=1 // pred_region
      _
    $region21: #{deterministic_policy_forward.1} parent=1 // pred_fallthru
      _
    // Predicated region
    $region22: #{deterministic_policy_forward.1} parent=1 // pred_check
      _
    $region23: #{deterministic_policy_forward.1} parent=1 // pred_check_branch
      %66 = sbr.rel (0) target = $region25
    $region24: #{deterministic_policy_forward.1} parent=1 // pred_region
      %68 = vsyncadd [#allocation8], 0
      %s69 = sshll.u32 %s5, 4
      %s70 = int_to_ptr.hbm [resolvable:$true] %s69
      %s71 = sshll.u32 [#allocation9], 4
      %s72 = int_to_ptr.vmem [resolvable:$true] %s71
      %77 = dma.hbm_to_vmem [thread:$0]  %s70, 2048, %s72, [#allocation8], 128, 128, 8
    $region25: #{deterministic_policy_forward.1} parent=1 // pred_fallthru
      _
    // Predicated region
    $region26: #{deterministic_policy_forward.1} parent=1 // pred_check
      _
    $region27: #{deterministic_policy_forward.1} parent=1 // pred_check_branch
      %79 = sbr.rel (0) target = $region29
    $region28: #{deterministic_policy_forward.1} parent=1 // pred_region
      _
    $region29: #{deterministic_policy_forward.1} parent=1 // pred_fallthru
      _
    // Predicated region
    $region30: #{deterministic_policy_forward.1} parent=1 // pred_check
      _
    $region31: #{deterministic_policy_forward.1} parent=1 // pred_check_branch
      %81 = sbr.rel (0) target = $region33
    $region32: #{deterministic_policy_forward.1} parent=1 // pred_region
      %83 = dma.done [#allocation3], 128
    $region33: #{deterministic_policy_forward.1} parent=1 // pred_fallthru
      _
    // Predicated region
    $region34: #{deterministic_policy_forward.1} parent=1 // pred_check
      _
    $region35: #{deterministic_policy_forward.1} parent=1 // pred_check_branch
      %85 = sbr.rel (0) target = $region37
    $region36: #{deterministic_policy_forward.1} parent=1 // pred_region
      %87 = dma.done [#allocation5], 256
    $region37: #{deterministic_policy_forward.1} parent=1 // pred_fallthru
      _
    // Predicated region
    $region38: #{deterministic_policy_forward.1} parent=1 // pred_check
      _
    $region39: #{deterministic_policy_forward.1} parent=1 // pred_check_branch
      %89 = sbr.rel (0) target = $region41
    $region40: #{deterministic_policy_forward.1} parent=1 // pred_region
      %91 = dma.done [#allocation5], 16
    $region41: #{deterministic_policy_forward.1} parent=1 // pred_fallthru
      _
    // Predicated region
    $region42: #{deterministic_policy_forward.1} parent=1 // pred_check
      _
    $region43: #{deterministic_policy_forward.1} parent=1 // pred_check_branch
      %93 = sbr.rel (0) target = $region45
    $region44: #{deterministic_policy_forward.1} parent=1 // pred_region
      %95 = dma.done [#allocation8], 2048
    $region45: #{deterministic_policy_forward.1} parent=1 // pred_fallthru
      _
    // Predicated region
    $region46: #{deterministic_policy_forward.1} parent=1 // pred_check
      _
    $region47: #{deterministic_policy_forward.1} parent=1 // pred_check_branch
      %97 = sbr.rel (0) target = $region49
    $region48: #{deterministic_policy_forward.1} parent=1 // pred_region
      %99 = dma.done [#allocation8], 2048
    $region49: #{deterministic_policy_forward.1} parent=1 // pred_fallthru
      _
    %v100 = vld [vmem:[#allocation2] sm:$0xff]
    %v101 = vld [vmem:[#allocation4] sm:$0xff]
    %v102 = vld [vmem:[#allocation4 + $0x8] sm:$0xff]
    %v103 = vld [vmem:[#allocation6] sm:$0x1]
    %v105 = vperm.slane %v103, 0
    %vm107 = vcmask 130048
    %v109 = vsel %vm107, %v100, 0
    %111 = vmatpush.msra.mxu0 0.0
    %112 = vmatpush.msra.mxu0 0.0
    %113 = vmatpush.msra.mxu0 0.0
    %114 = vmatpush.msra.mxu0 0.0
    %115 = vmatpush.msra.mxu0 0.0
    %116 = vmatpush.msra.mxu0 0.0
    %117 = vmatpush.msra.mxu0 0.0
    %118 = vmatpush.msra.mxu0 0.0
    %119 = vmatpush.msra.mxu0 0.0
    %120 = vmatpush.msra.mxu0 0.0
    %121 = vmatpush.msra.mxu0 0.0
    %122 = vmatpush.msra.mxu0 0.0
    %123 = vmatpush.msra.mxu0 0.0
    %124 = vmatpush.msra.mxu0 0.0
    %125 = vmatpush.msra.mxu0 %v102
    %126 = vmatpush.msra.mxu0 %v101
    %127 = vmatmul.f32.gmra.mxu0 %v109
    %v128 = vpop.f32.mrf.mxu0
    %v129 = vadd.f32 %v105, %v128
    %130 = vdwg.mxu0
    %v131 = vmax.f32 %v129, 0.0
    %v132 = vld [vmem:[#allocation7] sm:$0xff]
    %v133 = vld [vmem:[#allocation7 + $0x8] sm:$0xff]
    %v134 = vld [vmem:[#allocation7 + $0x10] sm:$0xff]
    %v135 = vld [vmem:[#allocation7 + $0x18] sm:$0xff]
    %v136 = vld [vmem:[#allocation7 + $0x20] sm:$0xff]
    %v137 = vld [vmem:[#allocation7 + $0x28] sm:$0xff]
    %v138 = vld [vmem:[#allocation7 + $0x30] sm:$0xff]
    %v139 = vld [vmem:[#allocation7 + $0x38] sm:$0xff]
    %v140 = vld [vmem:[#allocation7 + $0x40] sm:$0xff]
    %v141 = vld [vmem:[#allocation7 + $0x48] sm:$0xff]
    %v142 = vld [vmem:[#allocation7 + $0x50] sm:$0xff]
    %v143 = vld [vmem:[#allocation7 + $0x58] sm:$0xff]
    %v144 = vld [vmem:[#allocation7 + $0x60] sm:$0xff]
    %v145 = vld [vmem:[#allocation7 + $0x68] sm:$0xff]
    %v146 = vld [vmem:[#allocation7 + $0x70] sm:$0xff]
    %v147 = vld [vmem:[#allocation7 + $0x78] sm:$0xff]
    %v148 = vld [vmem:[%s4] sm:$0x1]
    %v150 = vperm.slane %v148, 0
    %152 = vmatpush.msra.mxu0 %v147
    %153 = vmatpush.msra.mxu0 %v146
    %154 = vmatpush.msra.mxu0 %v145
    %155 = vmatpush.msra.mxu0 %v144
    %156 = vmatpush.msra.mxu0 %v143
    %157 = vmatpush.msra.mxu0 %v142
    %158 = vmatpush.msra.mxu0 %v141
    %159 = vmatpush.msra.mxu0 %v140
    %160 = vmatpush.msra.mxu0 %v139
    %161 = vmatpush.msra.mxu0 %v138
    %162 = vmatpush.msra.mxu0 %v137
    %163 = vmatpush.msra.mxu0 %v136
    %164 = vmatpush.msra.mxu0 %v135
    %165 = vmatpush.msra.mxu0 %v134
    %166 = vmatpush.msra.mxu0 %v133
    %167 = vmatpush.msra.mxu0 %v132
    %168 = vmatmul.f32.gmra.mxu0 %v131
    %v169 = vpop.f32.mrf.mxu0
    %v170 = vadd.f32 %v150, %v169
    %171 = vdwg.mxu0
    %v172 = vmax.f32 %v170, 0.0
    %v173 = vld [vmem:[#allocation9] sm:$0xff]
    %v174 = vld [vmem:[#allocation9 + $0x8] sm:$0xff]
    %v175 = vld [vmem:[#allocation9 + $0x10] sm:$0xff]
    %v176 = vld [vmem:[#allocation9 + $0x18] sm:$0xff]
    %v177 = vld [vmem:[#allocation9 + $0x20] sm:$0xff]
    %v178 = vld [vmem:[#allocation9 + $0x28] sm:$0xff]
    %v179 = vld [vmem:[#allocation9 + $0x30] sm:$0xff]
    %v180 = vld [vmem:[#allocation9 + $0x38] sm:$0xff]
    %v181 = vld [vmem:[#allocation9 + $0x40] sm:$0xff]
    %v182 = vld [vmem:[#allocation9 + $0x48] sm:$0xff]
    %v183 = vld [vmem:[#allocation9 + $0x50] sm:$0xff]
    %v184 = vld [vmem:[#allocation9 + $0x58] sm:$0xff]
    %v185 = vld [vmem:[#allocation9 + $0x60] sm:$0xff]
    %v186 = vld [vmem:[#allocation9 + $0x68] sm:$0xff]
    %v187 = vld [vmem:[#allocation9 + $0x70] sm:$0xff]
    %v188 = vld [vmem:[#allocation9 + $0x78] sm:$0xff]
    %v189 = vld [vmem:[%s6] sm:$0x1]
    %v191 = vperm.slane %v189, 0
    %193 = vmatpush.msra.mxu0 %v188
    %194 = vmatpush.msra.mxu0 %v187
    %195 = vmatpush.msra.mxu0 %v186
    %196 = vmatpush.msra.mxu0 %v185
    %197 = vmatpush.msra.mxu0 %v184
    %198 = vmatpush.msra.mxu0 %v183
    %199 = vmatpush.msra.mxu0 %v182
    %200 = vmatpush.msra.mxu0 %v181
    %201 = vmatpush.msra.mxu0 %v180
    %202 = vmatpush.msra.mxu0 %v179
    %203 = vmatpush.msra.mxu0 %v178
    %204 = vmatpush.msra.mxu0 %v177
    %205 = vmatpush.msra.mxu0 %v176
    %206 = vmatpush.msra.mxu0 %v175
    %207 = vmatpush.msra.mxu0 %v174
    %208 = vmatpush.msra.mxu0 %v173
    %209 = vmatmul.f32.gmra.mxu0 %v172
    %v210 = vpop.f32.mrf.mxu0
    %v211 = vadd.f32 %v191, %v210
    %212 = vdwg.mxu0
    %v213 = vtanh.pop %v211
    %214 = vst [vmem:[%s7] sm:$0xff] %v213
    // Predicated region
    $region50: #{deterministic_policy_forward.1} parent=1 // pred_check
      _
    $region51: #{deterministic_policy_forward.1} parent=1 // pred_check_branch
      %216 = sbr.rel (0) target = $region53
    $region52: #{deterministic_policy_forward.1} parent=1 // pred_region
      _
    $region53: #{deterministic_policy_forward.1} parent=1 // pred_fallthru
      _
    // Predicated region
    $region54: #{deterministic_policy_forward.1} parent=1 // pred_check
      _
    $region55: #{deterministic_policy_forward.1} parent=1 // pred_check_branch
      %218 = sbr.rel (0) target = $region57
    $region56: #{deterministic_policy_forward.1} parent=1 // pred_region
      _
    $region57: #{deterministic_policy_forward.1} parent=1 // pred_fallthru
      _
    %219 = vsyncpa [#allocation3], 1
    %220 = vsyncpa [#allocation5], 1
    %221 = vsyncpa [#allocation8], 1

</llo_original>
